<compile_context>
chip_gen: v7x
topology: tpu7x:2x2x1
jax: 0.10.0
libtpu: 0.0.40
codegen_flags: <defaults>
</compile_context>

<pallas_src>
import functools

import jax
import jax.numpy as jnp
from jax.experimental import pallas as pl
from jax.experimental.pallas import tpu as pltpu

_HIDDEN = 128
# Plain Python float: a jnp.float32 scalar here would be captured as a kernel
# constant and rejected by pallas_call ("captures constants [f32[]]").
_NEG = -1e30


# ----------------------------------------------------------------------------
# Kernel: fused actor + critic MLP, lane-dense output slab.
# ----------------------------------------------------------------------------
def _fused_actor_critic_kernel(x_ref, w1_ref, b1_ref, w2_ref, b2_ref,
                               w3_ref, b3_ref, out_ref, *, action_dim):
    """out[:, :A] = log_softmax(actor_logits), out[:, A] = critic value."""
    cdt = w1_ref.dtype                 # bf16 for throughput, f32 for parity
    x = x_ref[...].astype(cdt)                                       # (bm, E)

    # Native-dtype MXU dots (bf16xbf16 or f32xf32); accumulation stays f32.
    h = jnp.dot(x, w1_ref[...], preferred_element_type=jnp.float32)
    h = jnp.maximum(h + b1_ref[...], 0.0)                            # (bm, 2H)
    h = jnp.dot(h.astype(cdt), w2_ref[...],
                preferred_element_type=jnp.float32)
    h = jnp.maximum(h + b2_ref[...], 0.0)                            # (bm, 2H)
    y = jnp.dot(h.astype(cdt), w3_ref[...],
                preferred_element_type=jnp.float32) + b3_ref[...]    # (bm, OUT)

    # Masked log-softmax over lanes [0, A); lane A carries the raw value.
    # Mask BEFORE exp so the value lane / zero-pad lanes never overflow.
    lane = jax.lax.broadcasted_iota(jnp.int32, y.shape, dimension=1)
    is_logit = lane < action_dim
    y_masked = jnp.where(is_logit, y, _NEG)
    m = jnp.max(y_masked, axis=1, keepdims=True)
    lse = jnp.log(jnp.sum(jnp.exp(y_masked - m), axis=1, keepdims=True)) + m
    out_ref[...] = jnp.where(is_logit, y - lse, y)


# ----------------------------------------------------------------------------
# Wrapper
# ----------------------------------------------------------------------------
def _pick_batch_tile(batch):
    """Batch tile for gridding, or None for a single un-gridded call.

    Policy (perf review): never emit tiles smaller than 256 rows (a 128-row
    LHS only half-fills the 256x256 MXU on v6e/v7x), prefer fat 1024/512-row
    tiles, and only grid when we get >= 2 tiles (so the "parallel" batch axis
    can shard across v7x's 2 TensorCores; a 2-step grid on single-TC v5e/v6e
    costs only one extra ~0.35us pipeline step).
    """
    for bm in (1024, 512, 256):
        if batch % bm == 0 and batch // bm >= 2:
            return bm
    return None


@functools.partial(jax.jit, static_argnames=("action_dim",))
def representation_forward(image, fused_params, action_dim):
    """image: (B, W, H, C) float32  ->  (value (B,), log_probs (B, A))."""
    batch = image.shape[0]
    # The (0,3,1,2) permutation is folded into w1's rows -> plain flatten here.
    x = image.reshape(batch, -1)                                     # (B, E)
    e = x.shape[1]

    w1, b1 = fused_params["w1"], fused_params["b1"]
    w2, b2 = fused_params["w2"], fused_params["b2"]
    w3, b3 = fused_params["w3"], fused_params["b3"]
    out_w = w3.shape[1]

    kernel = functools.partial(_fused_actor_critic_kernel, action_dim=action_dim)
    operands = (x, w1, b1, w2, b2, w3, b3)

    bm = _pick_batch_tile(batch)
    if bm is None:
        # Small / non-tileable batch: single invocation, no grid, no pipeline
        # prologue. Footprint is tiny (x + weights + out << default VMEM).
        out = pl.pallas_call(
            kernel,
            out_shape=jax.ShapeDtypeStruct((batch, out_w), jnp.float32),
        )(*operands)
    else:
        # Large batch: fat row tiles, weights resident (constant index_map so
        # they are never re-fetched), batch axis sharded across cores.
        def const(shape):
            return pl.BlockSpec(shape, lambda i, _s=shape: (0,) * len(_s))

        out = pl.pallas_call(
            kernel,
            out_shape=jax.ShapeDtypeStruct((batch, out_w), jnp.float32),
            grid=(batch // bm,),
            in_specs=[
                pl.BlockSpec((bm, e), lambda i: (i, 0)),
                const(w1.shape), const(b1.shape),
                const(w2.shape), const(b2.shape),
                const(w3.shape), const(b3.shape),
            ],
            out_specs=pl.BlockSpec((bm, out_w), lambda i: (i, 0)),
            compiler_params=pltpu.CompilerParams(
                dimension_semantics=("parallel",)),
        )(*operands)

    value = out[:, action_dim]          # critic value (lane A)
    log_probs = out[:, :action_dim]     # Categorical log-probs
    return value, log_probs


# ----------------------------------------------------------------------------
# Parameters (matches torch init_params) and fused packing
# ----------------------------------------------------------------------------
def _init_linear(key, fan_in, fan_out):
    """normal(0,1), row-normalized over fan_in, zero bias. Returns (W, b)."""
    w = jax.random.normal(key, (fan_out, fan_in), dtype=jnp.float32)
    w = w / jnp.sqrt(jnp.sum(w * w, axis=1, keepdims=True))
    b = jnp.zeros((1, fan_out), dtype=jnp.float32)
    return w.T, b                       # (fan_in, fan_out) so kernel does x @ W + b


def make_params(key, image_embedding_size, action_dim, hidden=_HIDDEN):
    keys = jax.random.split(key, 6)
    actor = (
        _init_linear(keys[0], image_embedding_size, hidden),
        _init_linear(keys[1], hidden, hidden),
        _init_linear(keys[2], hidden, action_dim),
    )
    critic = (
        _init_linear(keys[3], image_embedding_size, hidden),
        _init_linear(keys[4], hidden, hidden),
        _init_linear(keys[5], hidden, 1),
    )
    return {"actor": actor, "critic": critic}


def pack_params(params, image_whc, weight_dtype=jnp.bfloat16):
    """Fuse actor+critic weights for the kernel.

    * folds the torch (B,W,H,C)->(B,C,W,H) flatten permutation into W1's rows,
    * W1 = [actor | critic] columns, W2 block-diagonal, W3 block-structured
      with logits in lanes [0,A), the value at lane A, zero-padded to a
      multiple of 128 lanes (lane-dense output, unmasked stores).
    * weight_dtype=jnp.bfloat16 (default) halves weight DMA bytes and enables
      native bf16 MXU dots; pass jnp.float32 for bit-parity with PyTorch.
      Biases stay f32 (they add into the f32 accumulator).
    """
    (wa1, ba1), (wa2, ba2), (wa3, ba3) = params["actor"]
    (wc1, bc1), (wc2, bc2), (wc3, bc3) = params["critic"]
    w, h, c = image_whc
    e = w * h * c
    hid = wa2.shape[0]
    a = wa3.shape[1]
    out_w = ((a + 1 + 127) // 128) * 128

    # Original flatten order after transpose(1,3).transpose(2,3) is (C,W,H);
    # the wrapper flattens raw (W,H,C). Permute W1's rows accordingly.
    perm = jnp.transpose(jnp.arange(e).reshape(c, w, h), (1, 2, 0)).reshape(-1)

    w1 = jnp.concatenate([wa1[perm], wc1[perm]], axis=1)             # (E, 2H)
    b1 = jnp.concatenate([ba1, bc1], axis=1)                         # (1, 2H)

    w2 = jnp.zeros((2 * hid, 2 * hid), jnp.float32)
    w2 = w2.at[:hid, :hid].set(wa2).at[hid:, hid:].set(wc2)          # (2H, 2H)
    b2 = jnp.concatenate([ba2, bc2], axis=1)                         # (1, 2H)

    w3 = jnp.zeros((2 * hid, out_w), jnp.float32)
    w3 = w3.at[:hid, :a].set(wa3).at[hid:, a:a + 1].set(wc3)         # (2H, OUT)
    b3 = jnp.zeros((1, out_w), jnp.float32)
    b3 = b3.at[:, :a].set(ba3).at[:, a:a + 1].set(bc3)               # (1, OUT)

    return {"w1": w1.astype(weight_dtype), "b1": b1,
            "w2": w2.astype(weight_dtype), "b2": b2,
            "w3": w3.astype(weight_dtype), "b3": b3}


# ----------------------------------------------------------------------------
# Pure-JAX reference with the ORIGINAL (unfused, unpermuted) f32 parameters.
# ----------------------------------------------------------------------------
def _reference_forward(image, params):
    batch = image.shape[0]
    s = jnp.transpose(image, (0, 3, 1, 2)).reshape(batch, -1)

    def mlp(x, layers):
        for i, (wt, b) in enumerate(layers):
            x = jnp.dot(x, wt, precision=jax.lax.Precision.HIGHEST) + b
            if i < len(layers) - 1:
                x = jnp.maximum(x, 0.0)
        return x

    logits = mlp(s, params["actor"])
    logp = jax.nn.log_softmax(logits, axis=1)
    value = mlp(s, params["critic"])[:, 0]
    return value, logp


if __name__ == "__main__":
    # Non-CNN configuration: obs_space['image'] = (W, H, C) = (8, 8, 3),
    # action_space.n = 6  ->  image_embedding_size = 192.
    W, H, C = 8, 8, 3
    E = W * H * C
    A = 6

    key = jax.random.PRNGKey(0)
    k_img, k_params, k_img_big = jax.random.split(key, 3)

    params = make_params(k_params, E, A)
    fused_f32 = pack_params(params, (W, H, C), weight_dtype=jnp.float32)   # parity
    fused_bf16 = pack_params(params, (W, H, C))                            # throughput

    # --- small batch: un-gridded single-invocation path, f32 parity ---
    image = jax.random.normal(k_img, (2, W, H, C), dtype=jnp.float32)
    value, log_probs = representation_forward(image, fused_f32, A)
    jax.block_until_ready((value, log_probs))
    ref_value, ref_logp = _reference_forward(image, params)
    assert value.shape == (2,) and log_probs.shape == (2, A)
    assert jnp.allclose(value, ref_value, atol=1e-3, rtol=1e-3)
    assert jnp.allclose(log_probs, ref_logp, atol=1e-3, rtol=1e-3)

    # --- large batch: gridded, batch-parallel path (2 x 256-row tiles) ---
    image_big = jax.random.normal(k_img_big, (512, W, H, C), dtype=jnp.float32)
    value_b, log_probs_b = representation_forward(image_big, fused_f32, A)
    jax.block_until_ready((value_b, log_probs_b))
    ref_value_b, ref_logp_b = _reference_forward(image_big, params)
    assert jnp.allclose(value_b, ref_value_b, atol=1e-3, rtol=1e-3)
    assert jnp.allclose(log_probs_b, ref_logp_b, atol=1e-3, rtol=1e-3)

    # --- bf16 throughput path (looser tolerance vs. f32 reference) ---
    value_h, log_probs_h = representation_forward(image_big, fused_bf16, A)
    jax.block_until_ready((value_h, log_probs_h))
    assert jnp.allclose(value_h, ref_value_b, atol=1e-1, rtol=1e-1)
    assert jnp.allclose(log_probs_h, ref_logp_b, atol=1e-1, rtol=1e-1)

    print("KERNEL_OK")
</pallas_src>

<mosaic_0001>
module attributes {stable_mosaic.version = 11 : i64} {
  func.func @_fused_actor_critic_kernel(%arg0: memref<2x192xf32, #tpu.memory_space<vmem>>, %arg1: memref<192x256xf32, #tpu.memory_space<vmem>>, %arg2: memref<1x256xf32, #tpu.memory_space<vmem>>, %arg3: memref<256x256xf32, #tpu.memory_space<vmem>>, %arg4: memref<1x256xf32, #tpu.memory_space<vmem>>, %arg5: memref<256x128xf32, #tpu.memory_space<vmem>>, %arg6: memref<1x128xf32, #tpu.memory_space<vmem>>, %arg7: memref<2x128xf32, #tpu.memory_space<vmem>>) attributes {dimension_semantics = [], scalar_prefetch = 0 : i64, scratch_operands = 0 : i64, tpu.core_type = #tpu.core_type<tc>} {
    %c0 = arith.constant 0 : index
    %c0_0 = arith.constant 0 : index
    %0 = vector.load %arg0[%c0, %c0_0] : memref<2x192xf32, #tpu.memory_space<vmem>>, vector<2x192xf32>
    %c0_1 = arith.constant 0 : index
    %c0_2 = arith.constant 0 : index
    %1 = vector.load %arg1[%c0_1, %c0_2] : memref<192x256xf32, #tpu.memory_space<vmem>>, vector<192x256xf32>
    %cst = arith.constant dense<0.000000e+00> : vector<2x256xf32>
    %2 = tpu.matmul %0, %1, %cst {dimension_numbers = #tpu.dot_dimension_numbers<[1], [0], [0], [1], [0, 0, 1, 1], [], []>} : vector<2x192xf32>, vector<192x256xf32>, vector<2x256xf32> -> vector<2x256xf32>
    %c0_3 = arith.constant 0 : index
    %c0_4 = arith.constant 0 : index
    %3 = vector.load %arg2[%c0_3, %c0_4] : memref<1x256xf32, #tpu.memory_space<vmem>>, vector<1x256xf32>
    %4 = vector.broadcast %3 : vector<1x256xf32> to vector<2x256xf32>
    %5 = arith.addf %2, %4 : vector<2x256xf32>
    %cst_5 = arith.constant 0.000000e+00 : f32
    %6 = vector.broadcast %cst_5 : f32 to vector<2x256xf32>
    %7 = arith.maximumf %5, %6 : vector<2x256xf32>
    %c0_6 = arith.constant 0 : index
    %c0_7 = arith.constant 0 : index
    %8 = vector.load %arg3[%c0_6, %c0_7] : memref<256x256xf32, #tpu.memory_space<vmem>>, vector<256x256xf32>
    %cst_8 = arith.constant dense<0.000000e+00> : vector<2x256xf32>
    %9 = tpu.matmul %7, %8, %cst_8 {dimension_numbers = #tpu.dot_dimension_numbers<[1], [0], [0], [1], [0, 0, 1, 1], [], []>} : vector<2x256xf32>, vector<256x256xf32>, vector<2x256xf32> -> vector<2x256xf32>
    %c0_9 = arith.constant 0 : index
    %c0_10 = arith.constant 0 : index
    %10 = vector.load %arg4[%c0_9, %c0_10] : memref<1x256xf32, #tpu.memory_space<vmem>>, vector<1x256xf32>
    %11 = vector.broadcast %10 : vector<1x256xf32> to vector<2x256xf32>
    %12 = arith.addf %9, %11 : vector<2x256xf32>
    %cst_11 = arith.constant 0.000000e+00 : f32
    %13 = vector.broadcast %cst_11 : f32 to vector<2x256xf32>
    %14 = arith.maximumf %12, %13 : vector<2x256xf32>
    %c0_12 = arith.constant 0 : index
    %c0_13 = arith.constant 0 : index
    %15 = vector.load %arg5[%c0_12, %c0_13] : memref<256x128xf32, #tpu.memory_space<vmem>>, vector<256x128xf32>
    %cst_14 = arith.constant dense<0.000000e+00> : vector<2x128xf32>
    %16 = tpu.matmul %14, %15, %cst_14 {dimension_numbers = #tpu.dot_dimension_numbers<[1], [0], [0], [1], [0, 0, 1, 1], [], []>} : vector<2x256xf32>, vector<256x128xf32>, vector<2x128xf32> -> vector<2x128xf32>
    %c0_15 = arith.constant 0 : index
    %c0_16 = arith.constant 0 : index
    %17 = vector.load %arg6[%c0_15, %c0_16] : memref<1x128xf32, #tpu.memory_space<vmem>>, vector<1x128xf32>
    %18 = vector.broadcast %17 : vector<1x128xf32> to vector<2x128xf32>
    %19 = arith.addf %16, %18 : vector<2x128xf32>
    %20 = tpu.iota {dimensions = array<i32: 1>} : vector<2x128xi32>
    %c6_i32 = arith.constant 6 : i32
    %21 = vector.broadcast %c6_i32 : i32 to vector<2x128xi32>
    %22 = arith.cmpi slt, %20, %21 : vector<2x128xi32>
    %cst_17 = arith.constant -1.000000e+30 : f32
    %23 = vector.broadcast %cst_17 : f32 to vector<2x128xf32>
    %24 = arith.select %22, %19, %23 : vector<2x128xi1>, vector<2x128xf32>
    %cst_18 = arith.constant dense<0xFF800000> : vector<2xf32>
    %25 = vector.multi_reduction <maximumf>, %24, %cst_18 [1] : vector<2x128xf32> to vector<2xf32>
    %26 = vector.shape_cast %25 : vector<2xf32> to vector<2x1xf32>
    %27 = vector.broadcast %26 : vector<2x1xf32> to vector<2x128xf32>
    %28 = arith.subf %24, %27 : vector<2x128xf32>
    %29 = math.exp %28 : vector<2x128xf32>
    %cst_19 = arith.constant dense<0.000000e+00> : vector<2xf32>
    %30 = vector.multi_reduction <add>, %29, %cst_19 [1] : vector<2x128xf32> to vector<2xf32>
    %31 = vector.shape_cast %30 : vector<2xf32> to vector<2x1xf32>
    %32 = math.log %31 : vector<2x1xf32>
    %33 = arith.addf %32, %26 : vector<2x1xf32>
    %34 = vector.broadcast %33 : vector<2x1xf32> to vector<2x128xf32>
    %35 = arith.subf %19, %34 : vector<2x128xf32>
    %36 = arith.select %22, %35, %19 : vector<2x128xi1>, vector<2x128xf32>
    %c0_20 = arith.constant 0 : index
    %c0_21 = arith.constant 0 : index
    %37 = vector.load %arg7[%c0_20, %c0_21] : memref<2x128xf32, #tpu.memory_space<vmem>>, vector<2x128xf32>
    tpu.vector_store %arg7[%c0_20, %c0_21], %36 {strides = array<i32>} : memref<2x128xf32, #tpu.memory_space<vmem>>, vector<2x128xf32>,
    return
  }
}

</mosaic_0001>

<llo_original>
// kernel: representation_forward.1
$region0: #{representation_forward.1}
  #allocation0 [shape = 'u32[]', space=smem, size = 0x4, offset = 0x4, fixed_abs, tag = 'smem constant byte address 0x4 - core index']
  #allocation1 [shape = 'u32[144,128]{1,0:T(1,128)}', space=vmem, size = 0x12000, scoped, tag = 'internal scratch']
  %s0 = inlined_call_operand.vmem [shape: f32[2,192], index: 0, kind: input, shape index: {}]
  %s1 = inlined_call_operand.hbm [shape: f32[192,256], index: 1, kind: input, shape index: {}]
  %s2 = inlined_call_operand.vmem [shape: f32[1,256], index: 2, kind: input, shape index: {}]
  %s3 = inlined_call_operand.hbm [shape: f32[256,256], index: 3, kind: input, shape index: {}]
  %s4 = inlined_call_operand.vmem [shape: f32[1,256], index: 4, kind: input, shape index: {}]
  %s5 = inlined_call_operand.vmem [shape: f32[256,128], index: 5, kind: input, shape index: {}]
  %s6 = inlined_call_operand.vmem [shape: f32[1,128], index: 6, kind: input, shape index: {}]
  %s7 = inlined_call_operand.vmem [shape: f32[2,128], index: 7, kind: output, shape index: {}]
  %s8 = sld [smem:[#allocation0]]
  $region46: #{representation_forward.1} parent=0
    _
  %s10 = ssub.s32 1, %s8
  %s11 = scalar_select 0, %s10, %s8
  $region1: #{representation_forward.1} parent=0
    #allocation2 [shape = 'u8[196608]{0}', space=vmem, size = 0x30000, scoped, tag = 'input window, operand 1, single buffered']
    #allocation3 [shape = 's32[1]{0}', space=sflag, size = 0x4, scoped, tag = 'scoped memory for representation_forward.1']
    #allocation4 [shape = 'u8[262144]{0}', space=vmem, size = 0x40000, scoped, tag = 'input window, operand 3, single buffered']
    #allocation5 [shape = 's32[1]{0}', space=sflag, size = 0x4, scoped, tag = 'scoped memory for representation_forward.1']
    %12 = vsyncpa [#allocation3], 0
    %13 = vsyncpa [#allocation5], 0
    // Predicated region
    $region2: #{representation_forward.1} parent=1 // pred_check
      _
    $region3: #{representation_forward.1} parent=1 // pred_check_branch
      %15 = sbr.rel (0) target = $region5
    $region4: #{representation_forward.1} parent=1 // pred_region
      _
    $region5: #{representation_forward.1} parent=1 // pred_fallthru
      _
    // Predicated region
    $region6: #{representation_forward.1} parent=1 // pred_check
      _
    $region7: #{representation_forward.1} parent=1 // pred_check_branch
      %17 = sbr.rel (0) target = $region9
    $region8: #{representation_forward.1} parent=1 // pred_region
      %s19 = ssub.s32 6144, 6144
      %20 = vsyncadd [#allocation3], %s19
      %s21 = sshll.u32 [#allocation2], 4
      %s22 = int_to_ptr.vmem [resolvable:$true] %s21
      %27 = dma.hbm_to_vmem [thread:$0]  %s1, 6144, %s22, [#allocation3], 256, 256, 16
    $region9: #{representation_forward.1} parent=1 // pred_fallthru
      _
    // Predicated region
    $region10: #{representation_forward.1} parent=1 // pred_check
      _
    $region11: #{representation_forward.1} parent=1 // pred_check_branch
      %29 = sbr.rel (0) target = $region13
    $region12: #{representation_forward.1} parent=1 // pred_region
      _
    $region13: #{representation_forward.1} parent=1 // pred_fallthru
      _
    // Predicated region
    $region14: #{representation_forward.1} parent=1 // pred_check
      _
    $region15: #{representation_forward.1} parent=1 // pred_check_branch
      %31 = sbr.rel (0) target = $region17
    $region16: #{representation_forward.1} parent=1 // pred_region
      %s33 = ssub.s32 8192, 8192
      %34 = vsyncadd [#allocation5], %s33
      %s35 = sshll.u32 [#allocation4], 4
      %s36 = int_to_ptr.vmem [resolvable:$true] %s35
      %41 = dma.hbm_to_vmem [thread:$0]  %s3, 8192, %s36, [#allocation5], 256, 256, 16
    $region17: #{representation_forward.1} parent=1 // pred_fallthru
      _
    // Predicated region
    $region18: #{representation_forward.1} parent=1 // pred_check
      _
    $region19: #{representation_forward.1} parent=1 // pred_check_branch
      %43 = sbr.rel (0) target = $region21
    $region20: #{representation_forward.1} parent=1 // pred_region
      _
    $region21: #{representation_forward.1} parent=1 // pred_fallthru
      _
    // Predicated region
    $region22: #{representation_forward.1} parent=1 // pred_check
      _
    $region23: #{representation_forward.1} parent=1 // pred_check_branch
      %45 = sbr.rel (0) target = $region25
    $region24: #{representation_forward.1} parent=1 // pred_region
      _
    $region25: #{representation_forward.1} parent=1 // pred_fallthru
      _
    // Predicated region
    $region26: #{representation_forward.1} parent=1 // pred_check
      _
    $region27: #{representation_forward.1} parent=1 // pred_check_branch
      %47 = sbr.rel (0) target = $region29
    $region28: #{representation_forward.1} parent=1 // pred_region
      _
    $region29: #{representation_forward.1} parent=1 // pred_fallthru
      _
    // Predicated region
    $region30: #{representation_forward.1} parent=1 // pred_check
      _
    $region31: #{representation_forward.1} parent=1 // pred_check_branch
      %49 = sbr.rel (0) target = $region33
    $region32: #{representation_forward.1} parent=1 // pred_region
      %50 = dma.done [#allocation3], 6144
    $region33: #{representation_forward.1} parent=1 // pred_fallthru
      _
    // Predicated region
    $region34: #{representation_forward.1} parent=1 // pred_check
      _
    $region35: #{representation_forward.1} parent=1 // pred_check_branch
      %52 = sbr.rel (0) target = $region37
    $region36: #{representation_forward.1} parent=1 // pred_region
      %53 = dma.done [#allocation5], 8192
    $region37: #{representation_forward.1} parent=1 // pred_fallthru
      _
    %v54 = vld [vmem:[%s0] sm:$0xf]
    %v55 = vld [vmem:[#allocation2] sm:$0xff]
    %v56 = vld [vmem:[#allocation2 + $0x8] sm:$0xff]
    %v57 = vld [vmem:[#allocation2 + $0x10] sm:$0xff]
    %v58 = vld [vmem:[#allocation2 + $0x18] sm:$0xff]
    %v59 = vld [vmem:[#allocation2 + $0x20] sm:$0xff]
    %v60 = vld [vmem:[#allocation2 + $0x28] sm:$0xff]
    %v61 = vld [vmem:[#allocation2 + $0x30] sm:$0xff]
    %v62 = vld [vmem:[#allocation2 + $0x38] sm:$0xff]
    %v63 = vld [vmem:[#allocation2 + $0x40] sm:$0xff]
    %v64 = vld [vmem:[#allocation2 + $0x48] sm:$0xff]
    %v65 = vld [vmem:[#allocation2 + $0x50] sm:$0xff]
    %v66 = vld [vmem:[#allocation2 + $0x58] sm:$0xff]
    %v67 = vld [vmem:[#allocation2 + $0x60] sm:$0xff]
    %v68 = vld [vmem:[#allocation2 + $0x68] sm:$0xff]
    %v69 = vld [vmem:[#allocation2 + $0x70] sm:$0xff]
    %v70 = vld [vmem:[#allocation2 + $0x78] sm:$0xff]
    %v71 = vld [vmem:[#allocation2 + $0x80] sm:$0xff]
    %v72 = vld [vmem:[#allocation2 + $0x88] sm:$0xff]
    %v73 = vld [vmem:[#allocation2 + $0x90] sm:$0xff]
    %v74 = vld [vmem:[#allocation2 + $0x98] sm:$0xff]
    %v75 = vld [vmem:[#allocation2 + $0xa0] sm:$0xff]
    %v76 = vld [vmem:[#allocation2 + $0xa8] sm:$0xff]
    %v77 = vld [vmem:[#allocation2 + $0xb0] sm:$0xff]
    %v78 = vld [vmem:[#allocation2 + $0xb8] sm:$0xff]
    %v79 = vld [vmem:[#allocation2 + $0xc0] sm:$0xff]
    %v80 = vld [vmem:[#allocation2 + $0xc8] sm:$0xff]
    %v81 = vld [vmem:[#allocation2 + $0xd0] sm:$0xff]
    %v82 = vld [vmem:[#allocation2 + $0xd8] sm:$0xff]
    %v83 = vld [vmem:[#allocation2 + $0xe0] sm:$0xff]
    %v84 = vld [vmem:[#allocation2 + $0xe8] sm:$0xff]
    %v85 = vld [vmem:[#allocation2 + $0xf0] sm:$0xff]
    %v86 = vld [vmem:[#allocation2 + $0xf8] sm:$0xff]
    %v87 = vld [vmem:[#allocation2 + $0x100] sm:$0xff]
    %v88 = vld [vmem:[#allocation2 + $0x108] sm:$0xff]
    %v89 = vld [vmem:[#allocation2 + $0x110] sm:$0xff]
    %v90 = vld [vmem:[#allocation2 + $0x118] sm:$0xff]
    %v91 = vld [vmem:[#allocation2 + $0x120] sm:$0xff]
    %v92 = vld [vmem:[#allocation2 + $0x128] sm:$0xff]
    %v93 = vld [vmem:[#allocation2 + $0x130] sm:$0xff]
    %v94 = vld [vmem:[#allocation2 + $0x138] sm:$0xff]
    %v95 = vld [vmem:[#allocation2 + $0x140] sm:$0xff]
    %v96 = vld [vmem:[#allocation2 + $0x148] sm:$0xff]
    %v97 = vld [vmem:[#allocation2 + $0x150] sm:$0xff]
    %v98 = vld [vmem:[#allocation2 + $0x158] sm:$0xff]
    %v99 = vld [vmem:[#allocation2 + $0x160] sm:$0xff]
    %v100 = vld [vmem:[#allocation2 + $0x168] sm:$0xff]
    %v101 = vld [vmem:[#allocation2 + $0x170] sm:$0xff]
    %v102 = vld [vmem:[#allocation2 + $0x178] sm:$0xff]
    %v103 = vld [vmem:[%s2] sm:$0x3]
    %v105 = vlaneseq
    %v106 = vshrl.u32 %v105, 7
    %v107 = vsub.s32 0, %v106
    %v108 = vrot.slane %v103, %v107
    %v109 = vlaneseq
    %v110 = vshrl.u32 %v109, 7
    %v111 = vsub.s32 1, %v110
    %v112 = vrot.slane %v103, %v111
    %v117 = vunpack.c.l.s4 1983009808
    %v118 = vunpack.c.0.s8 %v117
    %v119 = vlaneseq
    %v120 = vshrl.u32 %v119, 7
    %v121 = vsub.s32 %v118, %v120
    %v122 = vrot.slane %v54, %v121
    %v123 = vcombine.high %v122, %v122
    %vm125 = vcmask 523264
    %v126 = vsel %vm125, %v123, 0
    %128 = vmatprep.subr.mxu0 %v56
    %129 = vmatpush1.msra.mxu0 %v55
    %130 = vmatprep.subr.mxu0 %v58
    %131 = vmatpush1.msra.mxu0 %v57
    %132 = vmatprep.subr.mxu0 %v60
    %133 = vmatpush1.msra.mxu0 %v59
    %134 = vmatprep.subr.mxu0 %v62
    %135 = vmatpush1.msra.mxu0 %v61
    %136 = vmatprep.subr.mxu0 %v64
    %137 = vmatpush1.msra.mxu0 %v63
    %138 = vmatprep.subr.mxu0 %v66
    %139 = vmatpush1.msra.mxu0 %v65
    %140 = vmatprep.subr.mxu0 %v68
    %141 = vmatpush1.msra.mxu0 %v67
    %142 = vmatprep.subr.mxu0 %v70
    %143 = vmatpush1.msra.mxu0 %v69
    %144 = vmatprep.subr.mxu0 %v72
    %145 = vmatpush1.msra.mxu0 %v71
    %146 = vmatprep.subr.mxu0 %v74
    %147 = vmatpush1.msra.mxu0 %v73
    %148 = vmatprep.subr.mxu0 %v76
    %149 = vmatpush1.msra.mxu0 %v75
    %150 = vmatprep.subr.mxu0 %v78
    %151 = vmatpush1.msra.mxu0 %v77
    %152 = vmatprep.subr.mxu0 %v80
    %153 = vmatpush1.msra.mxu0 %v79
    %154 = vmatprep.subr.mxu0 %v82
    %155 = vmatpush1.msra.mxu0 %v81
    %156 = vmatprep.subr.mxu0 %v84
    %157 = vmatpush1.msra.mxu0 %v83
    %158 = vmatprep.subr.mxu0 %v86
    %159 = vmatpush1.msra.mxu0 %v85
    %160 = vmatprep.subr.mxu0 %v88
    %161 = vmatpush1.msra.mxu0 %v87
    %162 = vmatprep.subr.mxu0 %v90
    %163 = vmatpush1.msra.mxu0 %v89
    %164 = vmatprep.subr.mxu0 %v92
    %165 = vmatpush1.msra.mxu0 %v91
    %166 = vmatprep.subr.mxu0 %v94
    %167 = vmatpush1.msra.mxu0 %v93
    %168 = vmatprep.subr.mxu0 %v96
    %169 = vmatpush1.msra.mxu0 %v95
    %170 = vmatprep.subr.mxu0 %v98
    %171 = vmatpush1.msra.mxu0 %v97
    %172 = vmatprep.subr.mxu0 %v100
    %173 = vmatpush1.msra.mxu0 %v99
    %174 = vmatprep.subr.mxu0 %v102
    %175 = vmatpush1.msra.mxu0 %v101
    %176 = vmatprep.subr.mxu0 0.0
    %177 = vmatpush1.msra.mxu0 0.0
    %178 = vmatprep.subr.mxu0 0.0
    %179 = vmatpush1.msra.mxu0 0.0
    %180 = vmatprep.subr.mxu0 0.0
    %181 = vmatpush1.msra.mxu0 0.0
    %182 = vmatprep.subr.mxu0 0.0
    %183 = vmatpush1.msra.mxu0 0.0
    %184 = vmatprep.subr.mxu0 0.0
    %185 = vmatpush1.msra.mxu0 0.0
    %186 = vmatprep.subr.mxu0 0.0
    %187 = vmatpush1.msra.mxu0 0.0
    %188 = vmatprep.subr.mxu0 0.0
    %189 = vmatpush1.msra.mxu0 0.0
    %190 = vmatprep.subr.mxu0 0.0
    %191 = vmatpush1.msra.mxu0 0.0
    %192 = vmatprep.mubr.f32.mxu0 %v126
    %193 = vmatmul.mubr.f32.gmra.mrb[0].mxu0 %v122
    %v194 = vpop.f32.mrb[0].mxu0
    %v195 = vadd.f32 %v108, %v194
    %v196 = vpop.f32.mrb[0].mxu0
    %v197 = vadd.f32 %v112, %v196
    %198 = vdwg.mxu0
    %v199 = vmax.f32 %v195, 0.0
    %v200 = vmax.f32 %v197, 0.0
    %v201 = vld [vmem:[#allocation4] sm:$0xff]
    %v202 = vld [vmem:[#allocation4 + $0x8] sm:$0xff]
    %v203 = vld [vmem:[#allocation4 + $0x10] sm:$0xff]
    %v204 = vld [vmem:[#allocation4 + $0x18] sm:$0xff]
    %v205 = vld [vmem:[#allocation4 + $0x20] sm:$0xff]
    %v206 = vld [vmem:[#allocation4 + $0x28] sm:$0xff]
    %v207 = vld [vmem:[#allocation4 + $0x30] sm:$0xff]
    %v208 = vld [vmem:[#allocation4 + $0x38] sm:$0xff]
    %v209 = vld [vmem:[#allocation4 + $0x40] sm:$0xff]
    %v210 = vld [vmem:[#allocation4 + $0x48] sm:$0xff]
    %v211 = vld [vmem:[#allocation4 + $0x50] sm:$0xff]
    %v212 = vld [vmem:[#allocation4 + $0x58] sm:$0xff]
    %v213 = vld [vmem:[#allocation4 + $0x60] sm:$0xff]
    %v214 = vld [vmem:[#allocation4 + $0x68] sm:$0xff]
    %v215 = vld [vmem:[#allocation4 + $0x70] sm:$0xff]
    %v216 = vld [vmem:[#allocation4 + $0x78] sm:$0xff]
    %v217 = vld [vmem:[#allocation4 + $0x80] sm:$0xff]
    %v218 = vld [vmem:[#allocation4 + $0x88] sm:$0xff]
    %v219 = vld [vmem:[#allocation4 + $0x90] sm:$0xff]
    %v220 = vld [vmem:[#allocation4 + $0x98] sm:$0xff]
    %v221 = vld [vmem:[#allocation4 + $0xa0] sm:$0xff]
    %v222 = vld [vmem:[#allocation4 + $0xa8] sm:$0xff]
    %v223 = vld [vmem:[#allocation4 + $0xb0] sm:$0xff]
    %v224 = vld [vmem:[#allocation4 + $0xb8] sm:$0xff]
    %v225 = vld [vmem:[#allocation4 + $0xc0] sm:$0xff]
    %v226 = vld [vmem:[#allocation4 + $0xc8] sm:$0xff]
    %v227 = vld [vmem:[#allocation4 + $0xd0] sm:$0xff]
    %v228 = vld [vmem:[#allocation4 + $0xd8] sm:$0xff]
    %v229 = vld [vmem:[#allocation4 + $0xe0] sm:$0xff]
    %v230 = vld [vmem:[#allocation4 + $0xe8] sm:$0xff]
    %v231 = vld [vmem:[#allocation4 + $0xf0] sm:$0xff]
    %v232 = vld [vmem:[#allocation4 + $0xf8] sm:$0xff]
    %v233 = vld [vmem:[#allocation4 + $0x100] sm:$0xff]
    %v234 = vld [vmem:[#allocation4 + $0x108] sm:$0xff]
    %v235 = vld [vmem:[#allocation4 + $0x110] sm:$0xff]
    %v236 = vld [vmem:[#allocation4 + $0x118] sm:$0xff]
    %v237 = vld [vmem:[#allocation4 + $0x120] sm:$0xff]
    %v238 = vld [vmem:[#allocation4 + $0x128] sm:$0xff]
    %v239 = vld [vmem:[#allocation4 + $0x130] sm:$0xff]
    %v240 = vld [vmem:[#allocation4 + $0x138] sm:$0xff]
    %v241 = vld [vmem:[#allocation4 + $0x140] sm:$0xff]
    %v242 = vld [vmem:[#allocation4 + $0x148] sm:$0xff]
    %v243 = vld [vmem:[#allocation4 + $0x150] sm:$0xff]
    %v244 = vld [vmem:[#allocation4 + $0x158] sm:$0xff]
    %v245 = vld [vmem:[#allocation4 + $0x160] sm:$0xff]
    %v246 = vld [vmem:[#allocation4 + $0x168] sm:$0xff]
    %v247 = vld [vmem:[#allocation4 + $0x170] sm:$0xff]
    %v248 = vld [vmem:[#allocation4 + $0x178] sm:$0xff]
    %v249 = vld [vmem:[#allocation4 + $0x180] sm:$0xff]
    %v250 = vld [vmem:[#allocation4 + $0x188] sm:$0xff]
    %v251 = vld [vmem:[#allocation4 + $0x190] sm:$0xff]
    %v252 = vld [vmem:[#allocation4 + $0x198] sm:$0xff]
    %v253 = vld [vmem:[#allocation4 + $0x1a0] sm:$0xff]
    %v254 = vld [vmem:[#allocation4 + $0x1a8] sm:$0xff]
    %v255 = vld [vmem:[#allocation4 + $0x1b0] sm:$0xff]
    %v256 = vld [vmem:[#allocation4 + $0x1b8] sm:$0xff]
    %v257 = vld [vmem:[#allocation4 + $0x1c0] sm:$0xff]
    %v258 = vld [vmem:[#allocation4 + $0x1c8] sm:$0xff]
    %v259 = vld [vmem:[#allocation4 + $0x1d0] sm:$0xff]
    %v260 = vld [vmem:[#allocation4 + $0x1d8] sm:$0xff]
    %v261 = vld [vmem:[#allocation4 + $0x1e0] sm:$0xff]
    %v262 = vld [vmem:[#allocation4 + $0x1e8] sm:$0xff]
    %v263 = vld [vmem:[#allocation4 + $0x1f0] sm:$0xff]
    %v264 = vld [vmem:[#allocation4 + $0x1f8] sm:$0xff]
    %v265 = vld [vmem:[%s4] sm:$0x3]
    %v267 = vlaneseq
    %v268 = vshrl.u32 %v267, 7
    %v269 = vsub.s32 0, %v268
    %v270 = vrot.slane %v265, %v269
    %v271 = vlaneseq
    %v272 = vshrl.u32 %v271, 7
    %v273 = vsub.s32 1, %v272
    %v274 = vrot.slane %v265, %v273
    %277 = vmatprep.subr.mxu0 %v202
    %278 = vmatpush1.msra.mxu0 %v201
    %279 = vmatprep.subr.mxu0 %v204
    %280 = vmatpush1.msra.mxu0 %v203
    %281 = vmatprep.subr.mxu0 %v206
    %282 = vmatpush1.msra.mxu0 %v205
    %283 = vmatprep.subr.mxu0 %v208
    %284 = vmatpush1.msra.mxu0 %v207
    %285 = vmatprep.subr.mxu0 %v210
    %286 = vmatpush1.msra.mxu0 %v209
    %287 = vmatprep.subr.mxu0 %v212
    %288 = vmatpush1.msra.mxu0 %v211
    %289 = vmatprep.subr.mxu0 %v214
    %290 = vmatpush1.msra.mxu0 %v213
    %291 = vmatprep.subr.mxu0 %v216
    %292 = vmatpush1.msra.mxu0 %v215
    %293 = vmatprep.subr.mxu0 %v218
    %294 = vmatpush1.msra.mxu0 %v217
    %295 = vmatprep.subr.mxu0 %v220
    %296 = vmatpush1.msra.mxu0 %v219
    %297 = vmatprep.subr.mxu0 %v222
    %298 = vmatpush1.msra.mxu0 %v221
    %299 = vmatprep.subr.mxu0 %v224
    %300 = vmatpush1.msra.mxu0 %v223
    %301 = vmatprep.subr.mxu0 %v226
    %302 = vmatpush1.msra.mxu0 %v225
    %303 = vmatprep.subr.mxu0 %v228
    %304 = vmatpush1.msra.mxu0 %v227
    %305 = vmatprep.subr.mxu0 %v230
    %306 = vmatpush1.msra.mxu0 %v229
    %307 = vmatprep.subr.mxu0 %v232
    %308 = vmatpush1.msra.mxu0 %v231
    %309 = vmatprep.subr.mxu0 %v234
    %310 = vmatpush1.msra.mxu0 %v233
    %311 = vmatprep.subr.mxu0 %v236
    %312 = vmatpush1.msra.mxu0 %v235
    %313 = vmatprep.subr.mxu0 %v238
    %314 = vmatpush1.msra.mxu0 %v237
    %315 = vmatprep.subr.mxu0 %v240
    %316 = vmatpush1.msra.mxu0 %v239
    %317 = vmatprep.subr.mxu0 %v242
    %318 = vmatpush1.msra.mxu0 %v241
    %319 = vmatprep.subr.mxu0 %v244
    %320 = vmatpush1.msra.mxu0 %v243
    %321 = vmatprep.subr.mxu0 %v246
    %322 = vmatpush1.msra.mxu0 %v245
    %323 = vmatprep.subr.mxu0 %v248
    %324 = vmatpush1.msra.mxu0 %v247
    %325 = vmatprep.subr.mxu0 %v250
    %326 = vmatpush1.msra.mxu0 %v249
    %327 = vmatprep.subr.mxu0 %v252
    %328 = vmatpush1.msra.mxu0 %v251
    %329 = vmatprep.subr.mxu0 %v254
    %330 = vmatpush1.msra.mxu0 %v253
    %331 = vmatprep.subr.mxu0 %v256
    %332 = vmatpush1.msra.mxu0 %v255
    %333 = vmatprep.subr.mxu0 %v258
    %334 = vmatpush1.msra.mxu0 %v257
    %335 = vmatprep.subr.mxu0 %v260
    %336 = vmatpush1.msra.mxu0 %v259
    %337 = vmatprep.subr.mxu0 %v262
    %338 = vmatpush1.msra.mxu0 %v261
    %339 = vmatprep.subr.mxu0 %v264
    %340 = vmatpush1.msra.mxu0 %v263
    %341 = vmatprep.mubr.f32.mxu0 %v200
    %342 = vmatmul.mubr.f32.gmra.mrb[0].mxu0 %v199
    %v343 = vpop.f32.mrb[0].mxu0
    %v344 = vadd.f32 %v270, %v343
    %v345 = vpop.f32.mrb[0].mxu0
    %v346 = vadd.f32 %v274, %v345
    %347 = vdwg.mxu0
    %v348 = vmax.f32 %v344, 0.0
    %v349 = vmax.f32 %v346, 0.0
    %v350 = vld [vmem:[%s5] sm:$0xff]
    %v351 = vld [vmem:[%s5 + $0x8] sm:$0xff]
    %v352 = vld [vmem:[%s5 + $0x10] sm:$0xff]
    %v353 = vld [vmem:[%s5 + $0x18] sm:$0xff]
    %v354 = vld [vmem:[%s5 + $0x20] sm:$0xff]
    %v355 = vld [vmem:[%s5 + $0x28] sm:$0xff]
    %v356 = vld [vmem:[%s5 + $0x30] sm:$0xff]
    %v357 = vld [vmem:[%s5 + $0x38] sm:$0xff]
    %v358 = vld [vmem:[%s5 + $0x40] sm:$0xff]
    %v359 = vld [vmem:[%s5 + $0x48] sm:$0xff]
    %v360 = vld [vmem:[%s5 + $0x50] sm:$0xff]
    %v361 = vld [vmem:[%s5 + $0x58] sm:$0xff]
    %v362 = vld [vmem:[%s5 + $0x60] sm:$0xff]
    %v363 = vld [vmem:[%s5 + $0x68] sm:$0xff]
    %v364 = vld [vmem:[%s5 + $0x70] sm:$0xff]
    %v365 = vld [vmem:[%s5 + $0x78] sm:$0xff]
    %v366 = vld [vmem:[%s5 + $0x80] sm:$0xff]
    %v367 = vld [vmem:[%s5 + $0x88] sm:$0xff]
    %v368 = vld [vmem:[%s5 + $0x90] sm:$0xff]
    %v369 = vld [vmem:[%s5 + $0x98] sm:$0xff]
    %v370 = vld [vmem:[%s5 + $0xa0] sm:$0xff]
    %v371 = vld [vmem:[%s5 + $0xa8] sm:$0xff]
    %v372 = vld [vmem:[%s5 + $0xb0] sm:$0xff]
    %v373 = vld [vmem:[%s5 + $0xb8] sm:$0xff]
    %v374 = vld [vmem:[%s5 + $0xc0] sm:$0xff]
    %v375 = vld [vmem:[%s5 + $0xc8] sm:$0xff]
    %v376 = vld [vmem:[%s5 + $0xd0] sm:$0xff]
    %v377 = vld [vmem:[%s5 + $0xd8] sm:$0xff]
    %v378 = vld [vmem:[%s5 + $0xe0] sm:$0xff]
    %v379 = vld [vmem:[%s5 + $0xe8] sm:$0xff]
    %v380 = vld [vmem:[%s5 + $0xf0] sm:$0xff]
    %v381 = vld [vmem:[%s5 + $0xf8] sm:$0xff]
    %v382 = vld [vmem:[%s6] sm:$0x1]
    %v384 = vlaneseq
    %v385 = vshrl.u32 %v384, 7
    %v386 = vsub.s32 0, %v385
    %v387 = vrot.slane %v382, %v386
    %389 = vmatprep.subr.mxu0 0.0
    %390 = vmatpush1.msra.mxu0 %v350
    %391 = vmatprep.subr.mxu0 0.0
    %392 = vmatpush1.msra.mxu0 %v351
    %393 = vmatprep.subr.mxu0 0.0
    %394 = vmatpush1.msra.mxu0 %v352
    %395 = vmatprep.subr.mxu0 0.0
    %396 = vmatpush1.msra.mxu0 %v353
    %397 = vmatprep.subr.mxu0 0.0
    %398 = vmatpush1.msra.mxu0 %v354
    %399 = vmatprep.subr.mxu0 0.0
    %400 = vmatpush1.msra.mxu0 %v355
    %401 = vmatprep.subr.mxu0 0.0
    %402 = vmatpush1.msra.mxu0 %v356
    %403 = vmatprep.subr.mxu0 0.0
    %404 = vmatpush1.msra.mxu0 %v357
    %405 = vmatprep.subr.mxu0 0.0
    %406 = vmatpush1.msra.mxu0 %v358
    %407 = vmatprep.subr.mxu0 0.0
    %408 = vmatpush1.msra.mxu0 %v359
    %409 = vmatprep.subr.mxu0 0.0
    %410 = vmatpush1.msra.mxu0 %v360
    %411 = vmatprep.subr.mxu0 0.0
    %412 = vmatpush1.msra.mxu0 %v361
    %413 = vmatprep.subr.mxu0 0.0
    %414 = vmatpush1.msra.mxu0 %v362
    %415 = vmatprep.subr.mxu0 0.0
    %416 = vmatpush1.msra.mxu0 %v363
    %417 = vmatprep.subr.mxu0 0.0
    %418 = vmatpush1.msra.mxu0 %v364
    %419 = vmatprep.subr.mxu0 0.0
    %420 = vmatpush1.msra.mxu0 %v365
    %421 = vmatprep.subr.mxu0 0.0
    %422 = vmatpush1.msra.mxu0 %v366
    %423 = vmatprep.subr.mxu0 0.0
    %424 = vmatpush1.msra.mxu0 %v367
    %425 = vmatprep.subr.mxu0 0.0
    %426 = vmatpush1.msra.mxu0 %v368
    %427 = vmatprep.subr.mxu0 0.0
    %428 = vmatpush1.msra.mxu0 %v369
    %429 = vmatprep.subr.mxu0 0.0
    %430 = vmatpush1.msra.mxu0 %v370
    %431 = vmatprep.subr.mxu0 0.0
    %432 = vmatpush1.msra.mxu0 %v371
    %433 = vmatprep.subr.mxu0 0.0
    %434 = vmatpush1.msra.mxu0 %v372
    %435 = vmatprep.subr.mxu0 0.0
    %436 = vmatpush1.msra.mxu0 %v373
    %437 = vmatprep.subr.mxu0 0.0
    %438 = vmatpush1.msra.mxu0 %v374
    %439 = vmatprep.subr.mxu0 0.0
    %440 = vmatpush1.msra.mxu0 %v375
    %441 = vmatprep.subr.mxu0 0.0
    %442 = vmatpush1.msra.mxu0 %v376
    %443 = vmatprep.subr.mxu0 0.0
    %444 = vmatpush1.msra.mxu0 %v377
    %445 = vmatprep.subr.mxu0 0.0
    %446 = vmatpush1.msra.mxu0 %v378
    %447 = vmatprep.subr.mxu0 0.0
    %448 = vmatpush1.msra.mxu0 %v379
    %449 = vmatprep.subr.mxu0 0.0
    %450 = vmatpush1.msra.mxu0 %v380
    %451 = vmatprep.subr.mxu0 0.0
    %452 = vmatpush1.msra.mxu0 %v381
    %453 = vmatprep.mubr.f32.mxu0 %v349
    %454 = vmatmul.mubr.f32.gmra.mrb[0].mxu0 %v348
    %v455 = vpop.f32.mrb[0].mxu0
    %v456 = vadd.f32 %v387, %v455
    %v457 = vpop.f32.mrb[0].mxu0
    %458 = vdwg.mxu0
    %v459 = vlaneseq
    %v460 = vand.u32 %v459, 127
    %vm461 = vcmp.lt.s32.totalorder %v460, 6
    %v462 = vsel %vm461, %v456, -1e+30
    %vm463 = vcmask 1041408
    %v464 = vsel %vm463, %v462, -inf
    %465 = vmax.xlane.f32.xlu0 %v464
    %v466 = vpop.xlane.xlu0 %465
    %v467 = vsub.f32 %v462, %v466
    %v468 = vmul.f32 %v467, 1.442695
    %v469 = vpow.pop %v468
    %v470 = vsel %vm463, %v469, 0.0
    %471 = vadd.xlane.f32.xlu0 %v470
    %v472 = vpop.xlane.xlu0 %471
    %v473 = vlog2.pop %v472
    %v474 = vmul.f32 %v473, 0.6931472
    %v475 = vadd.f32 %v474, %v466
    %v476 = vsub.f32 %v456, %v475
    %v477 = vsel %vm461, %v476, %v456
    %478 = vst [vmem:[%s7] sm:$0x3] %v477
    // Predicated region
    $region38: #{representation_forward.1} parent=1 // pred_check
      _
    $region39: #{representation_forward.1} parent=1 // pred_check_branch
      %480 = sbr.rel (0) target = $region41
    $region40: #{representation_forward.1} parent=1 // pred_region
      _
    $region41: #{representation_forward.1} parent=1 // pred_fallthru
      _
    // Predicated region
    $region42: #{representation_forward.1} parent=1 // pred_check
      _
    $region43: #{representation_forward.1} parent=1 // pred_check_branch
      %482 = sbr.rel (0) target = $region45
    $region44: #{representation_forward.1} parent=1 // pred_region
      _
    $region45: #{representation_forward.1} parent=1 // pred_fallthru
      _
    %483 = vsyncpa [#allocation3], 1
    %484 = vsyncpa [#allocation5], 1

</llo_original>
